<compile_context>
chip_gen: v6e
topology: v6e:2x2x1
jax: 0.10.0
libtpu: 0.0.40
codegen_flags: <defaults>
</compile_context>

<pallas_src>
import functools
import math

import jax
import jax.numpy as jnp
from jax import lax
from jax.experimental import pallas as pl
from jax.experimental.pallas import tpu as pltpu


# ----------------------------- small config ---------------------------------
BATCH = 2
SEQ = 8
HIDDEN = 32
LN_EPS = 1e-12
LANE = 128              # vreg lane width; each q/k/v block is padded to this
NEG_BIG = -1e30         # additive kill for cross-batch entries (finite, no NaN)


# ------------------------------ kernel ---------------------------------------
def sdpa_self_attention_kernel(x_ref, mask_ref, wqkv_ref, wo_ref, vec_ref,
                               out_ref, *, batch, seq, hidden):
    bs = batch * seq
    x2 = x_ref[...].reshape(bs, hidden)          # (B*S, H)  leading-dim reshape
    vecs = vec_ref[...]                          # (8, 128) packed vector params

    # Fused QKV projection: one MXU matmul, 3*128 (lane-aligned) output blocks.
    qkv = jnp.dot(x2, wqkv_ref[...],
                  preferred_element_type=jnp.float32)          # (B*S, 3*128)

    inv_scale = 1.0 / math.sqrt(hidden)
    # 128-lane-aligned splits (free views); padded lanes stay exactly zero.
    q = (qkv[:, 0 * LANE:1 * LANE] + vecs[0:1, :]) * inv_scale  # scale folded in
    k = qkv[:, 1 * LANE:2 * LANE] + vecs[1:2, :]
    v = qkv[:, 2 * LANE:3 * LANE] + vecs[2:3, :]

    # Attention scores: single (B*S, B*S) MXU push, contracting last dims
    # (no explicit transpose materialized).
    scores = jnp.einsum("qd,kd->qk", q, k,
                        preferred_element_type=jnp.float32)     # (B*S, B*S)

    # Block-diagonal multiplicative mask (module semantics) + additive kill of
    # cross-batch entries so batches cannot attend to each other.
    scores = scores * mask_ref[0] + mask_ref[1]

    # Numerically-stable softmax; reciprocal on the EUP slot.
    scores = scores - jnp.max(scores, axis=-1, keepdims=True)
    p = jnp.exp(scores)
    # TODO(synk): approx reciprocal adds ~1e-3 rel. error vs torch softmax.
    probs = p * pl.reciprocal(jnp.sum(p, axis=-1, keepdims=True), approx=True)
    # TODO(synk): dropout on attention probs skipped (inference).

    # Context: single (B*S, B*S) x (B*S, 128) push; padded lanes remain zero.
    ctx = jnp.dot(probs, v, preferred_element_type=jnp.float32)  # (B*S, 128)

    # BertSelfOutput: dense (wo padded to 128 input rows, zero rows for pad
    # lanes) + residual + LayerNorm (dropout = identity).
    out = (jnp.dot(ctx, wo_ref[...], preferred_element_type=jnp.float32)
           + vecs[3:4, 0:hidden])                                # (B*S, H)
    r = out + x2
    gamma = vecs[4:5, 0:hidden]
    beta = vecs[5:6, 0:hidden]
    mean = jnp.mean(r, axis=-1, keepdims=True)
    var = jnp.mean((r - mean) ** 2, axis=-1, keepdims=True)
    y = (r - mean) * lax.rsqrt(var + LN_EPS) * gamma + beta
    out_ref[...] = y.reshape(batch, seq, hidden)


# ------------------------------ wrapper ---------------------------------------
def bert_sdpa_self_attention(hidden_states, attention_mask, packed):
    """Single fused gridless pallas_call; all operands resident in VMEM."""
    B, S, H = hidden_states.shape
    bs = B * S
    dt = hidden_states.dtype

    # Build the (2, B*S, B*S) mask slab once in the wrapper (per review):
    #   slab[0]: block-diagonal MULTIPLICATIVE mask (module semantics),
    #   slab[1]: ADDITIVE -1e30 on cross-batch entries (0 on-diagonal blocks).
    eye = jnp.eye(B, dtype=dt)
    m_mult = (attention_mask[:, :, None, :] *
              eye[:, None, :, None]).reshape(bs, bs)
    m_add = jnp.where(eye[:, None, :, None] > 0,
                      jnp.zeros((), dt), jnp.full((), NEG_BIG, dt))
    m_add = jnp.broadcast_to(m_add, (B, S, B, S)).reshape(bs, bs)
    mask_slab = jnp.stack([m_mult, m_add], axis=0)               # (2, bs, bs)

    kernel = functools.partial(sdpa_self_attention_kernel,
                               batch=B, seq=S, hidden=H)
    vmem = pl.BlockSpec(memory_space=pltpu.MemorySpace.VMEM)
    return pl.pallas_call(
        kernel,
        out_shape=jax.ShapeDtypeStruct((B, S, H), jnp.float32),
        in_specs=[vmem] * 5,
        out_specs=vmem,
    )(hidden_states, mask_slab,
      packed["wqkv_pad"], packed["wo_pad"], packed["vec"])


# ------------------------- pure-JAX reference (sanity) ------------------------
def reference_forward(x, mask, p):
    B, S, H = x.shape
    q = x @ p["wq"] + p["bq"]
    k = x @ p["wk"] + p["bk"]
    v = x @ p["wv"] + p["bv"]
    s = jnp.einsum("bqd,bkd->bqk", q, k) / math.sqrt(H)
    s = s * mask
    probs = jax.nn.softmax(s, axis=-1)
    ctx = jnp.einsum("bqk,bkd->bqd", probs, v)
    o = ctx @ p["wo"] + p["bo"]
    r = o + x
    m = jnp.mean(r, axis=-1, keepdims=True)
    var = jnp.mean((r - m) ** 2, axis=-1, keepdims=True)
    return (r - m) / jnp.sqrt(var + LN_EPS) * p["ln_g"] + p["ln_b"]


# ------------------------------ params init / pack ----------------------------
def init_params(key):
    def nrm(k, shape, scale=0.02):
        return (scale * jax.random.normal(k, shape)).astype(jnp.float32)

    kq, kk, kv, ko = jax.random.split(key, 4)
    return {
        "wq": nrm(kq, (HIDDEN, HIDDEN)), "bq": jnp.zeros((HIDDEN,), jnp.float32),
        "wk": nrm(kk, (HIDDEN, HIDDEN)), "bk": jnp.zeros((HIDDEN,), jnp.float32),
        "wv": nrm(kv, (HIDDEN, HIDDEN)), "bv": jnp.zeros((HIDDEN,), jnp.float32),
        "wo": nrm(ko, (HIDDEN, HIDDEN)), "bo": jnp.zeros((HIDDEN,), jnp.float32),
        "ln_g": jnp.ones((HIDDEN,), jnp.float32),
        "ln_b": jnp.zeros((HIDDEN,), jnp.float32),
    }


def pack_params(p, hidden):
    """One-time (load-time) packing into DMA-friendly, lane-aligned slabs."""
    def pad_lanes(w):                    # (H, H) -> (H, 128), zero-padded lanes
        return jnp.pad(w, ((0, 0), (0, LANE - hidden)))

    wqkv_pad = jnp.concatenate(
        [pad_lanes(p["wq"]), pad_lanes(p["wk"]), pad_lanes(p["wv"])],
        axis=1).astype(jnp.float32)                          # (H, 3*128)
    wo_pad = jnp.pad(p["wo"],
                     ((0, LANE - hidden), (0, 0))).astype(jnp.float32)  # (128,H)

    vec = jnp.zeros((8, LANE), jnp.float32)                  # one (8,128) tile
    vec = vec.at[0, :hidden].set(p["bq"])
    vec = vec.at[1, :hidden].set(p["bk"])
    vec = vec.at[2, :hidden].set(p["bv"])
    vec = vec.at[3, :hidden].set(p["bo"])
    vec = vec.at[4, :hidden].set(p["ln_g"])
    vec = vec.at[5, :hidden].set(p["ln_b"])
    return {"wqkv_pad": wqkv_pad, "wo_pad": wo_pad, "vec": vec}


# ------------------------------ main ------------------------------------------
if __name__ == "__main__":
    key = jax.random.PRNGKey(0)
    k_params, k_x = jax.random.split(key)
    params = init_params(k_params)
    packed = pack_params(params, HIDDEN)

    hidden_states = (0.5 * jax.random.normal(k_x, (BATCH, SEQ, HIDDEN))
                     ).astype(jnp.float32)
    # Multiplicative attention mask, per the module spec; mask out the last two
    # key positions of the second batch element to exercise the masking path.
    attention_mask = jnp.ones((BATCH, SEQ, SEQ), jnp.float32)
    attention_mask = attention_mask.at[1, :, SEQ - 2:].set(0.0)

    fwd = jax.jit(bert_sdpa_self_attention)
    out = fwd(hidden_states, attention_mask, packed)
    out = jax.block_until_ready(out)

    ref = reference_forward(hidden_states, attention_mask, params)
    assert out.shape == (BATCH, SEQ, HIDDEN)
    assert jnp.allclose(out, ref, atol=1e-2, rtol=1e-2), \
        float(jnp.max(jnp.abs(out - ref)))

    print("KERNEL_OK")
</pallas_src>

<mosaic_0001>
module attributes {stable_mosaic.version = 11 : i64} {
  func.func @sdpa_self_attention_kernel(%arg0: memref<2x8x32xf32, #tpu.memory_space<vmem>>, %arg1: memref<2x16x16xf32, #tpu.memory_space<vmem>>, %arg2: memref<32x384xf32, #tpu.memory_space<vmem>>, %arg3: memref<128x32xf32, #tpu.memory_space<vmem>>, %arg4: memref<8x128xf32, #tpu.memory_space<vmem>>, %arg5: memref<2x8x32xf32, #tpu.memory_space<vmem>>) attributes {dimension_semantics = [], scalar_prefetch = 0 : i64, scratch_operands = 0 : i64, tpu.core_type = #tpu.core_type<tc>} {
    %c0 = arith.constant 0 : index
    %c0_0 = arith.constant 0 : index
    %c0_1 = arith.constant 0 : index
    %0 = vector.load %arg0[%c0, %c0_0, %c0_1] : memref<2x8x32xf32, #tpu.memory_space<vmem>>, vector<2x8x32xf32>
    %1 = vector.shape_cast %0 : vector<2x8x32xf32> to vector<16x32xf32>
    %c0_2 = arith.constant 0 : index
    %c0_3 = arith.constant 0 : index
    %2 = vector.load %arg4[%c0_2, %c0_3] : memref<8x128xf32, #tpu.memory_space<vmem>>, vector<8x128xf32>
    %c0_4 = arith.constant 0 : index
    %c0_5 = arith.constant 0 : index
    %3 = vector.load %arg2[%c0_4, %c0_5] : memref<32x384xf32, #tpu.memory_space<vmem>>, vector<32x384xf32>
    %cst = arith.constant dense<0.000000e+00> : vector<16x384xf32>
    %4 = tpu.matmul %1, %3, %cst {dimension_numbers = #tpu.dot_dimension_numbers<[1], [0], [0], [1], [0, 0, 1, 1], [], []>} : vector<16x32xf32>, vector<32x384xf32>, vector<16x384xf32> -> vector<16x384xf32>
    %5 = vector.extract_strided_slice %4 {offsets = [0, 0], sizes = [16, 128], strides = [1, 1]} : vector<16x384xf32> to vector<16x128xf32>
    %6 = vector.extract_strided_slice %2 {offsets = [0, 0], sizes = [1, 128], strides = [1, 1]} : vector<8x128xf32> to vector<1x128xf32>
    %7 = vector.broadcast %6 : vector<1x128xf32> to vector<16x128xf32>
    %8 = arith.addf %5, %7 : vector<16x128xf32>
    %cst_6 = arith.constant 0.176776692 : f32
    %9 = vector.broadcast %cst_6 : f32 to vector<16x128xf32>
    %10 = arith.mulf %8, %9 : vector<16x128xf32>
    %11 = vector.extract_strided_slice %4 {offsets = [0, 128], sizes = [16, 128], strides = [1, 1]} : vector<16x384xf32> to vector<16x128xf32>
    %12 = vector.extract_strided_slice %2 {offsets = [1, 0], sizes = [1, 128], strides = [1, 1]} : vector<8x128xf32> to vector<1x128xf32>
    %13 = vector.broadcast %12 : vector<1x128xf32> to vector<16x128xf32>
    %14 = arith.addf %11, %13 : vector<16x128xf32>
    %15 = vector.extract_strided_slice %4 {offsets = [0, 256], sizes = [16, 128], strides = [1, 1]} : vector<16x384xf32> to vector<16x128xf32>
    %16 = vector.extract_strided_slice %2 {offsets = [2, 0], sizes = [1, 128], strides = [1, 1]} : vector<8x128xf32> to vector<1x128xf32>
    %17 = vector.broadcast %16 : vector<1x128xf32> to vector<16x128xf32>
    %18 = arith.addf %15, %17 : vector<16x128xf32>
    "tpu.trace_start"() <{level = 10 : i32, message = "qd,kd->qk"}> : () -> ()
    %cst_7 = arith.constant dense<0.000000e+00> : vector<16x16xf32>
    %19 = tpu.matmul %10, %14, %cst_7 {dimension_numbers = #tpu.dot_dimension_numbers<[1], [1], [0], [0], [0, 0, 1, 0], [], []>} : vector<16x128xf32>, vector<16x128xf32>, vector<16x16xf32> -> vector<16x16xf32>
    "tpu.trace_stop"() : () -> ()
    %c0_8 = arith.constant 0 : index
    %c0_9 = arith.constant 0 : index
    %c0_10 = arith.constant 0 : index
    %20 = vector.load %arg1[%c0_8, %c0_9, %c0_10] : memref<2x16x16xf32, #tpu.memory_space<vmem>>, vector<1x16x16xf32>
    %21 = vector.shape_cast %20 : vector<1x16x16xf32> to vector<16x16xf32>
    %22 = arith.mulf %19, %21 : vector<16x16xf32>
    %c1 = arith.constant 1 : index
    %c0_11 = arith.constant 0 : index
    %c0_12 = arith.constant 0 : index
    %23 = vector.load %arg1[%c1, %c0_11, %c0_12] : memref<2x16x16xf32, #tpu.memory_space<vmem>>, vector<1x16x16xf32>
    %24 = vector.shape_cast %23 : vector<1x16x16xf32> to vector<16x16xf32>
    %25 = arith.addf %22, %24 : vector<16x16xf32>
    %cst_13 = arith.constant dense<0xFF800000> : vector<16xf32>
    %26 = vector.multi_reduction <maximumf>, %25, %cst_13 [1] : vector<16x16xf32> to vector<16xf32>
    %27 = vector.shape_cast %26 : vector<16xf32> to vector<16x1xf32>
    %28 = vector.broadcast %27 : vector<16x1xf32> to vector<16x16xf32>
    %29 = arith.subf %25, %28 : vector<16x16xf32>
    %30 = math.exp %29 : vector<16x16xf32>
    %cst_14 = arith.constant dense<0.000000e+00> : vector<16xf32>
    %31 = vector.multi_reduction <add>, %30, %cst_14 [1] : vector<16x16xf32> to vector<16xf32>
    %32 = vector.shape_cast %31 : vector<16xf32> to vector<16x1xf32>
    %33 = tpu.reciprocal %32 {approx = true} : vector<16x1xf32> -> vector<16x1xf32>
    %34 = vector.broadcast %33 : vector<16x1xf32> to vector<16x16xf32>
    %35 = arith.mulf %30, %34 : vector<16x16xf32>
    %cst_15 = arith.constant dense<0.000000e+00> : vector<16x128xf32>
    %36 = tpu.matmul %35, %18, %cst_15 {dimension_numbers = #tpu.dot_dimension_numbers<[1], [0], [0], [1], [0, 0, 1, 1], [], []>} : vector<16x16xf32>, vector<16x128xf32>, vector<16x128xf32> -> vector<16x128xf32>
    %c0_16 = arith.constant 0 : index
    %c0_17 = arith.constant 0 : index
    %37 = vector.load %arg3[%c0_16, %c0_17] : memref<128x32xf32, #tpu.memory_space<vmem>>, vector<128x32xf32>
    %cst_18 = arith.constant dense<0.000000e+00> : vector<16x32xf32>
    %38 = tpu.matmul %36, %37, %cst_18 {dimension_numbers = #tpu.dot_dimension_numbers<[1], [0], [0], [1], [0, 0, 1, 1], [], []>} : vector<16x128xf32>, vector<128x32xf32>, vector<16x32xf32> -> vector<16x32xf32>
    %39 = vector.extract_strided_slice %2 {offsets = [3, 0], sizes = [1, 32], strides = [1, 1]} : vector<8x128xf32> to vector<1x32xf32>
    %40 = vector.broadcast %39 : vector<1x32xf32> to vector<16x32xf32>
    %41 = arith.addf %38, %40 : vector<16x32xf32>
    %42 = arith.addf %41, %1 : vector<16x32xf32>
    %43 = vector.extract_strided_slice %2 {offsets = [4, 0], sizes = [1, 32], strides = [1, 1]} : vector<8x128xf32> to vector<1x32xf32>
    %44 = vector.extract_strided_slice %2 {offsets = [5, 0], sizes = [1, 32], strides = [1, 1]} : vector<8x128xf32> to vector<1x32xf32>
    %cst_19 = arith.constant dense<0.000000e+00> : vector<16xf32>
    %45 = vector.multi_reduction <add>, %42, %cst_19 [1] : vector<16x32xf32> to vector<16xf32>
    %46 = vector.shape_cast %45 : vector<16xf32> to vector<16x1xf32>
    %cst_20 = arith.constant 3.200000e+01 : f32
    %47 = vector.broadcast %cst_20 : f32 to vector<16x1xf32>
    %48 = arith.divf %46, %47 : vector<16x1xf32>
    %49 = vector.broadcast %48 : vector<16x1xf32> to vector<16x32xf32>
    %50 = arith.subf %42, %49 : vector<16x32xf32>
    %51 = arith.mulf %50, %50 : vector<16x32xf32>
    %cst_21 = arith.constant dense<0.000000e+00> : vector<16xf32>
    %52 = vector.multi_reduction <add>, %51, %cst_21 [1] : vector<16x32xf32> to vector<16xf32>
    %53 = vector.shape_cast %52 : vector<16xf32> to vector<16x1xf32>
    %cst_22 = arith.constant 3.200000e+01 : f32
    %54 = vector.broadcast %cst_22 : f32 to vector<16x1xf32>
    %55 = arith.divf %53, %54 : vector<16x1xf32>
    %56 = vector.broadcast %48 : vector<16x1xf32> to vector<16x32xf32>
    %57 = arith.subf %42, %56 : vector<16x32xf32>
    %cst_23 = arith.constant 9.99999996E-13 : f32
    %58 = vector.broadcast %cst_23 : f32 to vector<16x1xf32>
    %59 = arith.addf %55, %58 : vector<16x1xf32>
    %60 = math.rsqrt %59 : vector<16x1xf32>
    %61 = vector.broadcast %60 : vector<16x1xf32> to vector<16x32xf32>
    %62 = arith.mulf %57, %61 : vector<16x32xf32>
    %63 = vector.broadcast %43 : vector<1x32xf32> to vector<16x32xf32>
    %64 = arith.mulf %62, %63 : vector<16x32xf32>
    %65 = vector.broadcast %44 : vector<1x32xf32> to vector<16x32xf32>
    %66 = arith.addf %64, %65 : vector<16x32xf32>
    %67 = vector.shape_cast %66 : vector<16x32xf32> to vector<2x8x32xf32>
    %c0_24 = arith.constant 0 : index
    %c0_25 = arith.constant 0 : index
    %c0_26 = arith.constant 0 : index
    %68 = vector.load %arg5[%c0_24, %c0_25, %c0_26] : memref<2x8x32xf32, #tpu.memory_space<vmem>>, vector<2x8x32xf32>
    tpu.vector_store %arg5[%c0_24, %c0_25, %c0_26], %67 {strides = array<i32>} : memref<2x8x32xf32, #tpu.memory_space<vmem>>, vector<2x8x32xf32>,
    return
  }
}

</mosaic_0001>

<llo_original>
// kernel: bert_sdpa_self_attention.1
$region0: #{bert_sdpa_self_attention.1}
  #allocation0 [shape = 'u32[]', space=smem, size = 0x4, offset = 0x4, fixed_abs, tag = 'smem constant byte address 0x4 - core index']
  #allocation1 [shape = 'u32[144,128]{1,0:T(1,128)}', space=vmem, size = 0x12000, scoped, tag = 'internal scratch']
  %s0 = inlined_call_operand.vmem [shape: f32[2,8,32], index: 0, kind: input, shape index: {}]
  %s1 = inlined_call_operand.vmem [shape: f32[2,16,16], index: 1, kind: input, shape index: {}]
  %s2 = inlined_call_operand.vmem [shape: f32[32,384], index: 2, kind: input, shape index: {}]
  %s3 = inlined_call_operand.vmem [shape: f32[128,32], index: 3, kind: input, shape index: {}]
  %s4 = inlined_call_operand.vmem [shape: f32[8,128], index: 4, kind: input, shape index: {}]
  %s5 = inlined_call_operand.hbm [shape: f32[2,8,32], index: 5, kind: output, shape index: {}]
  %s6 = sld [smem:[#allocation0]]
  $region30: #{bert_sdpa_self_attention.1} parent=0
    _
  %s8 = ssub.s32 1, %s6
  %s9 = scalar_select 0, %s8, %s6
  $region1: #{bert_sdpa_self_attention.1} parent=0
    #allocation2 [shape = 'u8[8192]{0}', space=vmem, size = 0x2000, scoped, tag = 'output window, operand 0, single buffered']
    #allocation3 [shape = 's32[1]{0}', space=sflag, size = 0x4, scoped, tag = 'scoped memory for bert_sdpa_self_attention.1']
    %10 = vsyncpa [#allocation3], 0
    // Predicated region
    $region2: #{bert_sdpa_self_attention.1} parent=1 // pred_check
      _
    $region3: #{bert_sdpa_self_attention.1} parent=1 // pred_check_branch
      %12 = sbr.rel (0) target = $region5
    $region4: #{bert_sdpa_self_attention.1} parent=1 // pred_region
      _
    $region5: #{bert_sdpa_self_attention.1} parent=1 // pred_fallthru
      _
    // Predicated region
    $region6: #{bert_sdpa_self_attention.1} parent=1 // pred_check
      _
    $region7: #{bert_sdpa_self_attention.1} parent=1 // pred_check_branch
      %14 = sbr.rel (0) target = $region9
    $region8: #{bert_sdpa_self_attention.1} parent=1 // pred_region
      _
    $region9: #{bert_sdpa_self_attention.1} parent=1 // pred_fallthru
      _
    // Predicated region
    $region10: #{bert_sdpa_self_attention.1} parent=1 // pred_check
      _
    $region11: #{bert_sdpa_self_attention.1} parent=1 // pred_check_branch
      %16 = sbr.rel (0) target = $region13
    $region12: #{bert_sdpa_self_attention.1} parent=1 // pred_region
      _
    $region13: #{bert_sdpa_self_attention.1} parent=1 // pred_fallthru
      _
    // Predicated region
    $region14: #{bert_sdpa_self_attention.1} parent=1 // pred_check
      _
    $region15: #{bert_sdpa_self_attention.1} parent=1 // pred_check_branch
      %18 = sbr.rel (0) target = $region17
    $region16: #{bert_sdpa_self_attention.1} parent=1 // pred_region
      _
    $region17: #{bert_sdpa_self_attention.1} parent=1 // pred_fallthru
      _
    // Predicated region
    $region18: #{bert_sdpa_self_attention.1} parent=1 // pred_check
      _
    $region19: #{bert_sdpa_self_attention.1} parent=1 // pred_check_branch
      %20 = sbr.rel (0) target = $region21
    $region20: #{bert_sdpa_self_attention.1} parent=1 // pred_region
      _
    $region21: #{bert_sdpa_self_attention.1} parent=1 // pred_fallthru
      _
    %v21 = vld [vmem:[%s0] sm:$0xff]
    %v22 = vld [vmem:[%s0 + $0x8] sm:$0xff]
    %v23 = vld [vmem:[%s4] sm:$0xff]
    %v24 = vld [vmem:[%s2] sm:$0xff]
    %v25 = vld [vmem:[%s2 + $0x8] sm:$0xff]
    %v26 = vld [vmem:[%s2 + $0x10] sm:$0xff]
    %v27 = vld [vmem:[%s2 + $0x18] sm:$0xff]
    %v28 = vld [vmem:[%s2 + $0x20] sm:$0xff]
    %v29 = vld [vmem:[%s2 + $0x28] sm:$0xff]
    %v30 = vld [vmem:[%s2 + $0x30] sm:$0xff]
    %v31 = vld [vmem:[%s2 + $0x38] sm:$0xff]
    %v32 = vld [vmem:[%s2 + $0x40] sm:$0xff]
    %v33 = vld [vmem:[%s2 + $0x48] sm:$0xff]
    %v34 = vld [vmem:[%s2 + $0x50] sm:$0xff]
    %v35 = vld [vmem:[%s2 + $0x58] sm:$0xff]
    %vm36 = vcmask 261120
    %v38 = vsel %vm36, %v21, 0
    %v41 = vsel %vm36, %v22, 0
    %43 = vmatprep.subr.mxu0 0.0
    %44 = vmatpush1.msra.mxu0 0.0
    %45 = vmatprep.subr.mxu0 0.0
    %46 = vmatpush1.msra.mxu0 0.0
    %47 = vmatprep.subr.mxu0 0.0
    %48 = vmatpush1.msra.mxu0 0.0
    %49 = vmatprep.subr.mxu0 0.0
    %50 = vmatpush1.msra.mxu0 0.0
    %51 = vmatprep.subr.mxu0 0.0
    %52 = vmatpush1.msra.mxu0 0.0
    %53 = vmatprep.subr.mxu0 0.0
    %54 = vmatpush1.msra.mxu0 0.0
    %55 = vmatprep.subr.mxu0 0.0
    %56 = vmatpush1.msra.mxu0 0.0
    %57 = vmatprep.subr.mxu0 0.0
    %58 = vmatpush1.msra.mxu0 0.0
    %59 = vmatprep.subr.mxu0 0.0
    %60 = vmatpush1.msra.mxu0 0.0
    %61 = vmatprep.subr.mxu0 0.0
    %62 = vmatpush1.msra.mxu0 0.0
    %63 = vmatprep.subr.mxu0 0.0
    %64 = vmatpush1.msra.mxu0 0.0
    %65 = vmatprep.subr.mxu0 0.0
    %66 = vmatpush1.msra.mxu0 0.0
    %67 = vmatprep.subr.mxu0 %v34
    %68 = vmatpush1.msra.mxu0 %v33
    %69 = vmatprep.subr.mxu0 %v31
    %70 = vmatpush1.msra.mxu0 %v30
    %71 = vmatprep.subr.mxu0 %v28
    %72 = vmatpush1.msra.mxu0 %v27
    %73 = vmatprep.subr.mxu0 %v25
    %74 = vmatpush1.msra.mxu0 %v24
    %75 = vmatprep.subr.mxu0 0.0
    %76 = vmatpush2.msra.mxu0 0.0
    %77 = vmatprep.subr.mxu0 0.0
    %78 = vmatpush2.msra.mxu0 0.0
    %79 = vmatprep.subr.mxu0 0.0
    %80 = vmatpush2.msra.mxu0 0.0
    %81 = vmatprep.subr.mxu0 0.0
    %82 = vmatpush2.msra.mxu0 0.0
    %83 = vmatprep.subr.mxu0 0.0
    %84 = vmatpush2.msra.mxu0 0.0
    %85 = vmatprep.subr.mxu0 0.0
    %86 = vmatpush2.msra.mxu0 0.0
    %87 = vmatprep.subr.mxu0 0.0
    %88 = vmatpush2.msra.mxu0 0.0
    %89 = vmatprep.subr.mxu0 0.0
    %90 = vmatpush2.msra.mxu0 0.0
    %91 = vmatprep.subr.mxu0 0.0
    %92 = vmatpush2.msra.mxu0 0.0
    %93 = vmatprep.subr.mxu0 0.0
    %94 = vmatpush2.msra.mxu0 0.0
    %95 = vmatprep.subr.mxu0 0.0
    %96 = vmatpush2.msra.mxu0 0.0
    %97 = vmatprep.subr.mxu0 0.0
    %98 = vmatpush2.msra.mxu0 0.0
    %99 = vmatprep.subr.mxu0 0.0
    %100 = vmatpush2.msra.mxu0 0.0
    %101 = vmatprep.subr.mxu0 0.0
    %102 = vmatpush2.msra.mxu0 0.0
    %103 = vmatprep.subr.mxu0 0.0
    %104 = vmatpush2.msra.mxu0 0.0
    %105 = vmatprep.subr.mxu0 0.0
    %106 = vmatpush2.msra.mxu0 0.0
    %107 = vmatprep.mubr.f32.mxu0 0.0
    %108 = vmatmul.mubr.f32.gmra.mxu0 %v38
    %v109 = vpop.f32.mrf.mxu0
    %v110 = vadd.f32 0.0, %v109
    %v111 = vpop.f32.mrf.mxu0
    %v112 = vadd.f32 0.0, %v111
    %113 = vmatprep.mubr.f32.mxu0 0.0
    %114 = vmatmul.mubr.f32.gmra.mxu0 %v41
    %v115 = vpop.f32.mrf.mxu0
    %v116 = vadd.f32 0.0, %v115
    %v117 = vpop.f32.mrf.mxu0
    %v118 = vadd.f32 0.0, %v117
    %119 = vdwg.mxu0
    %120 = vmatprep.subr.mxu0 0.0
    %121 = vmatpush1.msra.mxu0 0.0
    %122 = vmatprep.subr.mxu0 0.0
    %123 = vmatpush1.msra.mxu0 0.0
    %124 = vmatprep.subr.mxu0 0.0
    %125 = vmatpush1.msra.mxu0 0.0
    %126 = vmatprep.subr.mxu0 0.0
    %127 = vmatpush1.msra.mxu0 0.0
    %128 = vmatprep.subr.mxu0 0.0
    %129 = vmatpush1.msra.mxu0 0.0
    %130 = vmatprep.subr.mxu0 0.0
    %131 = vmatpush1.msra.mxu0 0.0
    %132 = vmatprep.subr.mxu0 0.0
    %133 = vmatpush1.msra.mxu0 0.0
    %134 = vmatprep.subr.mxu0 0.0
    %135 = vmatpush1.msra.mxu0 0.0
    %136 = vmatprep.subr.mxu0 0.0
    %137 = vmatpush1.msra.mxu0 0.0
    %138 = vmatprep.subr.mxu0 0.0
    %139 = vmatpush1.msra.mxu0 0.0
    %140 = vmatprep.subr.mxu0 0.0
    %141 = vmatpush1.msra.mxu0 0.0
    %142 = vmatprep.subr.mxu0 0.0
    %143 = vmatpush1.msra.mxu0 0.0
    %144 = vmatprep.subr.mxu0 0.0
    %145 = vmatpush1.msra.mxu0 %v35
    %146 = vmatprep.subr.mxu0 0.0
    %147 = vmatpush1.msra.mxu0 %v32
    %148 = vmatprep.subr.mxu0 0.0
    %149 = vmatpush1.msra.mxu0 %v29
    %150 = vmatprep.subr.mxu0 0.0
    %151 = vmatpush1.msra.mxu0 %v26
    %152 = vmatprep.subr.mxu0 0.0
    %153 = vmatpush2.msra.mxu0 0.0
    %154 = vmatprep.subr.mxu0 0.0
    %155 = vmatpush2.msra.mxu0 0.0
    %156 = vmatprep.subr.mxu0 0.0
    %157 = vmatpush2.msra.mxu0 0.0
    %158 = vmatprep.subr.mxu0 0.0
    %159 = vmatpush2.msra.mxu0 0.0
    %160 = vmatprep.subr.mxu0 0.0
    %161 = vmatpush2.msra.mxu0 0.0
    %162 = vmatprep.subr.mxu0 0.0
    %163 = vmatpush2.msra.mxu0 0.0
    %164 = vmatprep.subr.mxu0 0.0
    %165 = vmatpush2.msra.mxu0 0.0
    %166 = vmatprep.subr.mxu0 0.0
    %167 = vmatpush2.msra.mxu0 0.0
    %168 = vmatprep.subr.mxu0 0.0
    %169 = vmatpush2.msra.mxu0 0.0
    %170 = vmatprep.subr.mxu0 0.0
    %171 = vmatpush2.msra.mxu0 0.0
    %172 = vmatprep.subr.mxu0 0.0
    %173 = vmatpush2.msra.mxu0 0.0
    %174 = vmatprep.subr.mxu0 0.0
    %175 = vmatpush2.msra.mxu0 0.0
    %176 = vmatprep.subr.mxu0 0.0
    %177 = vmatpush2.msra.mxu0 0.0
    %178 = vmatprep.subr.mxu0 0.0
    %179 = vmatpush2.msra.mxu0 0.0
    %180 = vmatprep.subr.mxu0 0.0
    %181 = vmatpush2.msra.mxu0 0.0
    %182 = vmatprep.subr.mxu0 0.0
    %183 = vmatpush2.msra.mxu0 0.0
    %184 = vmatprep.mubr.f32.mxu0 0.0
    %185 = vmatmul.mubr.f32.gmra.mxu0 %v38
    %v186 = vpop.f32.mrf.mxu0
    %v187 = vadd.f32 0.0, %v186
    %v188 = vpop.f32.mrf.mxu0
    %189 = vmatprep.mubr.f32.mxu0 0.0
    %190 = vmatmul.mubr.f32.gmra.mxu0 %v41
    %v191 = vpop.f32.mrf.mxu0
    %v192 = vadd.f32 0.0, %v191
    %v193 = vpop.f32.mrf.mxu0
    %194 = vdwg.mxu0
    %v195 = vlaneseq
    %v196 = vshrl.u32 %v195, 7
    %v197 = vsub.s32 0, %v196
    %v198 = vrot.slane %v23, %v197
    %v199 = vadd.f32 %v110, %v198
    %v200 = vadd.f32 %v116, %v198
    %v201 = vmul.f32 %v199, 0.17677669
    %v202 = vmul.f32 %v200, 0.17677669
    %v203 = vlaneseq
    %v204 = vshrl.u32 %v203, 7
    %v205 = vsub.s32 1, %v204
    %v206 = vrot.slane %v23, %v205
    %v207 = vadd.f32 %v112, %v206
    %v208 = vadd.f32 %v118, %v206
    %v209 = vlaneseq
    %v210 = vshrl.u32 %v209, 7
    %v211 = vsub.s32 2, %v210
    %v212 = vrot.slane %v23, %v211
    %v213 = vadd.f32 %v187, %v212
    %v214 = vadd.f32 %v192, %v212
    %215 = vmatprep.subr.mxu0 0.0
    %216 = vmatpush1.xpose.msra.mxu0 0.0
    %217 = vmatprep.subr.mxu0 0.0
    %218 = vmatpush1.xpose.msra.mxu0 0.0
    %219 = vmatprep.subr.mxu0 0.0
    %220 = vmatpush1.xpose.msra.mxu0 0.0
    %221 = vmatprep.subr.mxu0 0.0
    %222 = vmatpush1.xpose.msra.mxu0 0.0
    %223 = vmatprep.subr.mxu0 0.0
    %224 = vmatpush1.xpose.msra.mxu0 0.0
    %225 = vmatprep.subr.mxu0 0.0
    %226 = vmatpush1.xpose.msra.mxu0 0.0
    %227 = vmatprep.subr.mxu0 0.0
    %228 = vmatpush1.xpose.msra.mxu0 0.0
    %229 = vmatprep.subr.mxu0 0.0
    %230 = vmatpush1.xpose.msra.mxu0 0.0
    %231 = vmatprep.subr.mxu0 0.0
    %232 = vmatpush1.xpose.msra.mxu0 0.0
    %233 = vmatprep.subr.mxu0 0.0
    %234 = vmatpush1.xpose.msra.mxu0 0.0
    %235 = vmatprep.subr.mxu0 0.0
    %236 = vmatpush1.xpose.msra.mxu0 0.0
    %237 = vmatprep.subr.mxu0 0.0
    %238 = vmatpush1.xpose.msra.mxu0 0.0
    %239 = vmatprep.subr.mxu0 0.0
    %240 = vmatpush1.xpose.msra.mxu0 0.0
    %241 = vmatprep.subr.mxu0 0.0
    %242 = vmatpush1.xpose.msra.mxu0 0.0
    %243 = vmatprep.subr.mxu0 0.0
    %244 = vmatpush1.xpose.msra.mxu0 %v208
    %245 = vmatprep.subr.mxu0 0.0
    %246 = vmatpush1.xpose.msra.mxu0 %v207
    %247 = vmatprep.subr.mxu0 0.0
    %248 = vmatpush2.xpose.msra.mxu0 0.0
    %249 = vmatprep.subr.mxu0 0.0
    %250 = vmatpush2.xpose.msra.mxu0 0.0
    %251 = vmatprep.subr.mxu0 0.0
    %252 = vmatpush2.xpose.msra.mxu0 0.0
    %253 = vmatprep.subr.mxu0 0.0
    %254 = vmatpush2.xpose.msra.mxu0 0.0
    %255 = vmatprep.subr.mxu0 0.0
    %256 = vmatpush2.xpose.msra.mxu0 0.0
    %257 = vmatprep.subr.mxu0 0.0
    %258 = vmatpush2.xpose.msra.mxu0 0.0
    %259 = vmatprep.subr.mxu0 0.0
    %260 = vmatpush2.xpose.msra.mxu0 0.0
    %261 = vmatprep.subr.mxu0 0.0
    %262 = vmatpush2.xpose.msra.mxu0 0.0
    %263 = vmatprep.subr.mxu0 0.0
    %264 = vmatpush2.xpose.msra.mxu0 0.0
    %265 = vmatprep.subr.mxu0 0.0
    %266 = vmatpush2.xpose.msra.mxu0 0.0
    %267 = vmatprep.subr.mxu0 0.0
    %268 = vmatpush2.xpose.msra.mxu0 0.0
    %269 = vmatprep.subr.mxu0 0.0
    %270 = vmatpush2.xpose.msra.mxu0 0.0
    %271 = vmatprep.subr.mxu0 0.0
    %272 = vmatpush2.xpose.msra.mxu0 0.0
    %273 = vmatprep.subr.mxu0 0.0
    %274 = vmatpush2.xpose.msra.mxu0 0.0
    %275 = vmatprep.subr.mxu0 0.0
    %276 = vmatpush2.xpose.msra.mxu0 0.0
    %277 = vmatprep.subr.mxu0 0.0
    %278 = vmatpush2.xpose.msra.mxu0 0.0
    %279 = vmatprep.mubr.f32.mxu0 0.0
    %280 = vmatmul.mubr.f32.gmra.mxu0 %v201
    %v281 = vpop.f32.mrf.mxu0
    %v282 = vadd.f32 0.0, %v281
    %v283 = vpop.f32.mrf.mxu0
    %284 = vmatprep.mubr.f32.mxu0 0.0
    %285 = vmatmul.mubr.f32.gmra.mxu0 %v202
    %v286 = vpop.f32.mrf.mxu0
    %v287 = vadd.f32 0.0, %v286
    %v288 = vpop.f32.mrf.mxu0
    %289 = vdwg.mxu0
    %v290 = vld [vmem:[%s1] sm:$0xff]
    %v291 = vld [vmem:[%s1 + $0x8] sm:$0xff]
    %v292 = vmul.f32 %v282, %v290
    %v293 = vmul.f32 %v287, %v291
    %s294 = scalar_lea.vmem %s1, 16
    %v295 = vld [vmem:[%s294] sm:$0xff]
    %v296 = vld [vmem:[%s294 + $0x8] sm:$0xff]
    %v297 = vadd.f32 %v292, %v295
    %v298 = vadd.f32 %v293, %v296
    %vm299 = vcmask 130048
    %v300 = vsel %vm299, %v297, -inf
    %301 = vmax.xlane.f32.xlu0 %v300
    %v302 = vpop.xlane.xlu0 %301
    %v303 = vsel %vm299, %v298, -inf
    %304 = vmax.xlane.f32.xlu0 %v303
    %v305 = vpop.xlane.xlu0 %304
    %v306 = vsub.f32 %v297, %v302
    %v307 = vsub.f32 %v298, %v305
    %v308 = vmul.f32 %v306, 1.442695
    %v309 = vpow.pop %v308
    %v310 = vmul.f32 %v307, 1.442695
    %v311 = vpow.pop %v310
    %v312 = vsel %vm299, %v309, 0.0
    %313 = vadd.xlane.f32.xlu0 %v312
    %v314 = vpop.xlane.xlu0 %313
    %v315 = vsel %vm299, %v311, 0.0
    %316 = vadd.xlane.f32.xlu0 %v315
    %v317 = vpop.xlane.xlu0 %316
    %v318 = vrcp.pop %v314
    %v319 = vrcp.pop %v317
    %v320 = vmul.f32 %v309, %v318
    %v321 = vmul.f32 %v311, %v319
    %v323 = vsel %vm299, %v320, 0
    %v326 = vsel %vm299, %v321, 0
    %328 = vmatprep.subr.mxu0 0.0
    %329 = vmatpush1.msra.mxu0 0.0
    %330 = vmatprep.subr.mxu0 0.0
    %331 = vmatpush1.msra.mxu0 0.0
    %332 = vmatprep.subr.mxu0 0.0
    %333 = vmatpush1.msra.mxu0 0.0
    %334 = vmatprep.subr.mxu0 0.0
    %335 = vmatpush1.msra.mxu0 0.0
    %336 = vmatprep.subr.mxu0 0.0
    %337 = vmatpush1.msra.mxu0 0.0
    %338 = vmatprep.subr.mxu0 0.0
    %339 = vmatpush1.msra.mxu0 0.0
    %340 = vmatprep.subr.mxu0 0.0
    %341 = vmatpush1.msra.mxu0 0.0
    %342 = vmatprep.subr.mxu0 0.0
    %343 = vmatpush1.msra.mxu0 0.0
    %344 = vmatprep.subr.mxu0 0.0
    %345 = vmatpush1.msra.mxu0 0.0
    %346 = vmatprep.subr.mxu0 0.0
    %347 = vmatpush1.msra.mxu0 0.0
    %348 = vmatprep.subr.mxu0 0.0
    %349 = vmatpush1.msra.mxu0 0.0
    %350 = vmatprep.subr.mxu0 0.0
    %351 = vmatpush1.msra.mxu0 0.0
    %352 = vmatprep.subr.mxu0 0.0
    %353 = vmatpush1.msra.mxu0 0.0
    %354 = vmatprep.subr.mxu0 0.0
    %355 = vmatpush1.msra.mxu0 0.0
    %356 = vmatprep.subr.mxu0 0.0
    %357 = vmatpush1.msra.mxu0 %v214
    %358 = vmatprep.subr.mxu0 0.0
    %359 = vmatpush1.msra.mxu0 %v213
    %360 = vmatprep.subr.mxu0 0.0
    %361 = vmatpush2.msra.mxu0 0.0
    %362 = vmatprep.subr.mxu0 0.0
    %363 = vmatpush2.msra.mxu0 0.0
    %364 = vmatprep.subr.mxu0 0.0
    %365 = vmatpush2.msra.mxu0 0.0
    %366 = vmatprep.subr.mxu0 0.0
    %367 = vmatpush2.msra.mxu0 0.0
    %368 = vmatprep.subr.mxu0 0.0
    %369 = vmatpush2.msra.mxu0 0.0
    %370 = vmatprep.subr.mxu0 0.0
    %371 = vmatpush2.msra.mxu0 0.0
    %372 = vmatprep.subr.mxu0 0.0
    %373 = vmatpush2.msra.mxu0 0.0
    %374 = vmatprep.subr.mxu0 0.0
    %375 = vmatpush2.msra.mxu0 0.0
    %376 = vmatprep.subr.mxu0 0.0
    %377 = vmatpush2.msra.mxu0 0.0
    %378 = vmatprep.subr.mxu0 0.0
    %379 = vmatpush2.msra.mxu0 0.0
    %380 = vmatprep.subr.mxu0 0.0
    %381 = vmatpush2.msra.mxu0 0.0
    %382 = vmatprep.subr.mxu0 0.0
    %383 = vmatpush2.msra.mxu0 0.0
    %384 = vmatprep.subr.mxu0 0.0
    %385 = vmatpush2.msra.mxu0 0.0
    %386 = vmatprep.subr.mxu0 0.0
    %387 = vmatpush2.msra.mxu0 0.0
    %388 = vmatprep.subr.mxu0 0.0
    %389 = vmatpush2.msra.mxu0 0.0
    %390 = vmatprep.subr.mxu0 0.0
    %391 = vmatpush2.msra.mxu0 0.0
    %392 = vmatprep.mubr.f32.mxu0 0.0
    %393 = vmatmul.mubr.f32.gmra.mxu0 %v323
    %v394 = vpop.f32.mrf.mxu0
    %v395 = vadd.f32 0.0, %v394
    %v396 = vpop.f32.mrf.mxu0
    %397 = vmatprep.mubr.f32.mxu0 0.0
    %398 = vmatmul.mubr.f32.gmra.mxu0 %v326
    %v399 = vpop.f32.mrf.mxu0
    %v400 = vadd.f32 0.0, %v399
    %v401 = vpop.f32.mrf.mxu0
    %402 = vdwg.mxu0
    %v403 = vld [vmem:[%s3] sm:$0xff]
    %v404 = vld [vmem:[%s3 + $0x8] sm:$0xff]
    %v405 = vld [vmem:[%s3 + $0x10] sm:$0xff]
    %v406 = vld [vmem:[%s3 + $0x18] sm:$0xff]
    %v407 = vld [vmem:[%s3 + $0x20] sm:$0xff]
    %v408 = vld [vmem:[%s3 + $0x28] sm:$0xff]
    %v409 = vld [vmem:[%s3 + $0x30] sm:$0xff]
    %v410 = vld [vmem:[%s3 + $0x38] sm:$0xff]
    %v411 = vld [vmem:[%s3 + $0x40] sm:$0xff]
    %v412 = vld [vmem:[%s3 + $0x48] sm:$0xff]
    %v413 = vld [vmem:[%s3 + $0x50] sm:$0xff]
    %v414 = vld [vmem:[%s3 + $0x58] sm:$0xff]
    %v415 = vld [vmem:[%s3 + $0x60] sm:$0xff]
    %v416 = vld [vmem:[%s3 + $0x68] sm:$0xff]
    %v417 = vld [vmem:[%s3 + $0x70] sm:$0xff]
    %v418 = vld [vmem:[%s3 + $0x78] sm:$0xff]
    %v419 = vlaneseq
    %v420 = vshrl.u32 %v419, 7
    %v421 = vsub.s32 3, %v420
    %v422 = vrot.slane %v23, %v421
    %423 = vmatprep.subr.mxu0 0.0
    %424 = vmatpush1.msra.mxu0 %v418
    %425 = vmatprep.subr.mxu0 0.0
    %426 = vmatpush1.msra.mxu0 %v417
    %427 = vmatprep.subr.mxu0 0.0
    %428 = vmatpush1.msra.mxu0 %v416
    %429 = vmatprep.subr.mxu0 0.0
    %430 = vmatpush1.msra.mxu0 %v415
    %431 = vmatprep.subr.mxu0 0.0
    %432 = vmatpush1.msra.mxu0 %v414
    %433 = vmatprep.subr.mxu0 0.0
    %434 = vmatpush1.msra.mxu0 %v413
    %435 = vmatprep.subr.mxu0 0.0
    %436 = vmatpush1.msra.mxu0 %v412
    %437 = vmatprep.subr.mxu0 0.0
    %438 = vmatpush1.msra.mxu0 %v411
    %439 = vmatprep.subr.mxu0 0.0
    %440 = vmatpush1.msra.mxu0 %v410
    %441 = vmatprep.subr.mxu0 0.0
    %442 = vmatpush1.msra.mxu0 %v409
    %443 = vmatprep.subr.mxu0 0.0
    %444 = vmatpush1.msra.mxu0 %v408
    %445 = vmatprep.subr.mxu0 0.0
    %446 = vmatpush1.msra.mxu0 %v407
    %447 = vmatprep.subr.mxu0 0.0
    %448 = vmatpush1.msra.mxu0 %v406
    %449 = vmatprep.subr.mxu0 0.0
    %450 = vmatpush1.msra.mxu0 %v405
    %451 = vmatprep.subr.mxu0 0.0
    %452 = vmatpush1.msra.mxu0 %v404
    %453 = vmatprep.subr.mxu0 0.0
    %454 = vmatpush1.msra.mxu0 %v403
    %455 = vmatprep.subr.mxu0 0.0
    %456 = vmatpush2.msra.mxu0 0.0
    %457 = vmatprep.subr.mxu0 0.0
    %458 = vmatpush2.msra.mxu0 0.0
    %459 = vmatprep.subr.mxu0 0.0
    %460 = vmatpush2.msra.mxu0 0.0
    %461 = vmatprep.subr.mxu0 0.0
    %462 = vmatpush2.msra.mxu0 0.0
    %463 = vmatprep.subr.mxu0 0.0
    %464 = vmatpush2.msra.mxu0 0.0
    %465 = vmatprep.subr.mxu0 0.0
    %466 = vmatpush2.msra.mxu0 0.0
    %467 = vmatprep.subr.mxu0 0.0
    %468 = vmatpush2.msra.mxu0 0.0
    %469 = vmatprep.subr.mxu0 0.0
    %470 = vmatpush2.msra.mxu0 0.0
    %471 = vmatprep.subr.mxu0 0.0
    %472 = vmatpush2.msra.mxu0 0.0
    %473 = vmatprep.subr.mxu0 0.0
    %474 = vmatpush2.msra.mxu0 0.0
    %475 = vmatprep.subr.mxu0 0.0
    %476 = vmatpush2.msra.mxu0 0.0
    %477 = vmatprep.subr.mxu0 0.0
    %478 = vmatpush2.msra.mxu0 0.0
    %479 = vmatprep.subr.mxu0 0.0
    %480 = vmatpush2.msra.mxu0 0.0
    %481 = vmatprep.subr.mxu0 0.0
    %482 = vmatpush2.msra.mxu0 0.0
    %483 = vmatprep.subr.mxu0 0.0
    %484 = vmatpush2.msra.mxu0 0.0
    %485 = vmatprep.subr.mxu0 0.0
    %486 = vmatpush2.msra.mxu0 0.0
    %487 = vmatprep.mubr.f32.mxu0 0.0
    %488 = vmatmul.mubr.f32.gmra.mxu0 %v395
    %v489 = vpop.f32.mrf.mxu0
    %v490 = vadd.f32 %v422, %v489
    %v491 = vpop.f32.mrf.mxu0
    %492 = vmatprep.mubr.f32.mxu0 0.0
    %493 = vmatmul.mubr.f32.gmra.mxu0 %v400
    %v494 = vpop.f32.mrf.mxu0
    %v495 = vadd.f32 %v422, %v494
    %v496 = vpop.f32.mrf.mxu0
    %497 = vdwg.mxu0
    %v498 = vadd.f32 %v490, %v21
    %v499 = vadd.f32 %v495, %v22
    %v500 = vsel %vm36, %v498, 0.0
    %501 = vadd.xlane.f32.xlu0 %v500
    %v502 = vpop.xlane.xlu0 %501
    %v503 = vsel %vm36, %v499, 0.0
    %504 = vadd.xlane.f32.xlu0 %v503
    %v505 = vpop.xlane.xlu0 %504
    %v506 = vrcp.pop 32.0
    %v507 = vmul.f32 %v502, %v506
    %v508 = vmul.f32 %v505, %v506
    %v509 = vsub.f32 %v498, %v507
    %v510 = vsub.f32 %v499, %v508
    %v511 = vmul.f32 %v509, %v509
    %v512 = vmul.f32 %v510, %v510
    %v513 = vsel %vm36, %v511, 0.0
    %514 = vadd.xlane.f32.xlu0 %v513
    %v515 = vpop.xlane.xlu0 %514
    %v516 = vsel %vm36, %v512, 0.0
    %517 = vadd.xlane.f32.xlu0 %v516
    %v518 = vpop.xlane.xlu0 %517
    %v519 = vmul.f32 %v515, %v506
    %v520 = vmul.f32 %v518, %v506
    %v521 = vadd.f32 %v519, 1e-12
    %v522 = vadd.f32 %v520, 1e-12
    %v523 = vrsqrt.pop %v521
    %v524 = vrsqrt.pop %v522
    %v525 = vmul.f32 %v509, %v523
    %v526 = vmul.f32 %v510, %v524
    %v527 = vlaneseq
    %v528 = vshrl.u32 %v527, 7
    %v529 = vsub.s32 4, %v528
    %v530 = vrot.slane %v23, %v529
    %v531 = vmul.f32 %v525, %v530
    %v532 = vmul.f32 %v526, %v530
    %v533 = vlaneseq
    %v534 = vshrl.u32 %v533, 7
    %v535 = vsub.s32 5, %v534
    %v536 = vrot.slane %v23, %v535
    %v537 = vadd.f32 %v531, %v536
    %v538 = vadd.f32 %v532, %v536
    %539 = vst.msk [vmem:[#allocation2] sm:$0xff] %vm36, %v537
    %540 = vst.msk [vmem:[#allocation2 + $0x8] sm:$0xff] %vm36, %v538
    // Predicated region
    $region22: #{bert_sdpa_self_attention.1} parent=1 // pred_check
      _
    $region23: #{bert_sdpa_self_attention.1} parent=1 // pred_check_branch
      %542 = sbr.rel (0) target = $region25
    $region24: #{bert_sdpa_self_attention.1} parent=1 // pred_region
      %s544 = ssub.s32 256, 256
      %545 = vsyncadd [#allocation3], %s544
      %s546 = sshll.u32 [#allocation2], 4
      %s547 = int_to_ptr.vmem [resolvable:$true] %s546
      %552 = dma.vmem_to_hbm [thread:$0]  %s547, 256, %s5, [#allocation3], 128, 128, 8
    $region25: #{bert_sdpa_self_attention.1} parent=1 // pred_fallthru
      _
    // Predicated region
    $region26: #{bert_sdpa_self_attention.1} parent=1 // pred_check
      _
    $region27: #{bert_sdpa_self_attention.1} parent=1 // pred_check_branch
      %554 = sbr.rel (0) target = $region29
    $region28: #{bert_sdpa_self_attention.1} parent=1 // pred_region
      %555 = dma.done [#allocation3], 256
    $region29: #{bert_sdpa_self_attention.1} parent=1 // pred_fallthru
      _
    %556 = vsyncpa [#allocation3], 1

</llo_original>
